<compile_context>
chip_gen: v6e
topology: v6e:2x2x1
jax: 0.10.0
libtpu: 0.0.40
codegen_flags: <defaults>
</compile_context>

<pallas_src>
import jax
import jax.numpy as jnp
from jax.experimental import pallas as pl
from jax.experimental.pallas import tpu as pltpu

_EPS = 1e-8  # F.cosine_similarity default eps


def _cdiv(a, b):
    return (a + b - 1) // b


def _round_up(x, m):
    return _cdiv(x, m) * m


def _vmem_capacity_bytes():
    """Physical per-core VMEM, with a v7x-safe fallback if the query fails."""
    try:
        info = pltpu.get_tpu_info()
        cap = getattr(info, "vmem_capacity_bytes", None)
        if cap:
            return int(cap)
    except Exception:
        pass
    return 64 << 20


def make_feature_refinement_loss(loss_weight=1.0, margin=0.1,
                                 stability_weight=0.1, reduction="mean",
                                 rows_tile=None, hw_tile=None):
    assert reduction in ("mean", "sum")

    def loss_fn(original_features, enhanced_features, text_pooled):
        # original_features / enhanced_features: (B, C, H, W); text_pooled: (B, C)
        B, C, H, W = original_features.shape
        assert enhanced_features.shape == (B, C, H, W)
        assert text_pooled.shape == (B, C)  # feat_proj=None path: D == C

        rows, hw = B * C, H * W

        # Lane/sublane-dense slab: rows -> sublanes, spatial -> lanes.  reshape of a
        # contiguous (B,C,H,W) array is a no-op bitcast; dtype preserved (bf16 stays bf16).
        orig2 = original_features.reshape(rows, hw)
        enh2 = enhanced_features.reshape(rows, hw)
        itemsize = jnp.dtype(orig2.dtype).itemsize

        # ---- per-generation tile / VMEM budget ----
        big_vmem = _vmem_capacity_bytes() >= (100 << 20)     # v5e/v6e: 128 MiB physical
        tile_elems = (2 << 20) if big_vmem else (1 << 20)    # per input, per buffer
        vmem_cap = (100 << 20) if big_vmem else (50 << 20)   # scoped-VMEM request ceiling

        # ---- row tiling (parallel axis): minimize alignment slack; expose >= 2 blocks
        #      whenever rows allow so both v7x TensorCores get work. ----
        if rows_tile is not None:
            rt = _round_up(min(rows_tile, _round_up(rows, 8)), 8)
        else:
            row_tiles = _cdiv(rows, 256)
            if row_tiles == 1 and rows > 8:
                row_tiles = 2
            rt = _round_up(_cdiv(rows, row_tiles), 8)
        row_tiles = _cdiv(rows, rt)

        # ---- hw tiling (reduction axis): biggest tile within budget, rounded so the
        #      slack is at most one 128-lane group. ----
        if hw_tile is not None:
            ht = _round_up(min(hw_tile, _round_up(hw, 128)), 128)
        else:
            ht_max = max(128, ((tile_elems // rt) // 128) * 128)
            ht = _round_up(_cdiv(hw, _cdiv(hw, ht_max)), 128)
            ht = min(ht, _round_up(hw, 128))
        hw_tiles = _cdiv(hw, ht)

        # If the row axis only has one block (tiny B*C), split the HW tiles into two
        # "parallel" groups so megacore (v7x) still sees >= 2 parallel blocks.  Each
        # group accumulates its own partial outputs; the JAX epilogue sums them.
        hw_outer = 2 if (row_tiles == 1 and hw_tiles >= 2) else 1
        kper = _cdiv(hw_tiles, hw_outer)

        # Ragged tails are masked in-kernel (no jnp.pad slab copy).  The mask also
        # neutralizes the clamped duplicate tile when hw_outer * kper > hw_tiles.
        need_mask = (hw % ht != 0) or (hw_outer * kper != hw_tiles)

        r_pad = row_tiles * rt
        grid = (row_tiles, hw_outer, kper)

        def kernel(orig_ref, enh_ref, po_ref, pe_ref, ss_ref):
            k = pl.program_id(2)

            # Single pass per element: load once, derive pooled sums + squared diff.
            o = orig_ref[...].astype(jnp.float32)
            e = enh_ref[...].astype(jnp.float32)

            if need_mask:
                # Global lane offset of this tile; lanes >= hw (including fully
                # out-of-range clamped duplicate tiles) contribute exactly zero.
                hw_start = (pl.program_id(1) * kper + k) * ht
                lane = jax.lax.broadcasted_iota(jnp.int32, o.shape, 1)
                valid = (lane + hw_start) < hw
                o = jnp.where(valid, o, 0.0)
                e = jnp.where(valid, e, 0.0)

            d = e - o
            po = jnp.sum(o, axis=-1, keepdims=True)          # (rt, 1)
            pe = jnp.sum(e, axis=-1, keepdims=True)
            ss = jnp.sum(d * d, axis=-1, keepdims=True)

            @pl.when(k == 0)
            def _init():
                po_ref[...] = jnp.zeros_like(po_ref)
                pe_ref[...] = jnp.zeros_like(pe_ref)
                ss_ref[...] = jnp.zeros_like(ss_ref)

            po_ref[...] += po
            pe_ref[...] += pe
            ss_ref[...] += ss

        def in_map(i, g, k):
            # Clamp so the (rare) overshoot tile of an uneven hw_outer split still
            # addresses valid HBM; its contribution is masked to zero in-kernel.
            return (i, jnp.minimum(g * kper + k, hw_tiles - 1))

        in_spec = pl.BlockSpec((rt, ht), in_map)
        out_spec = pl.BlockSpec((None, rt, 1), lambda i, g, k: (g, i, 0))
        out_sds = jax.ShapeDtypeStruct((hw_outer, r_pad, 1), jnp.float32)

        # VMEM: 2 inputs x 2 buffers, (rt,1)->(rt,128)-padded double-buffered outputs,
        # plus generous headroom for f32 elementwise temporaries.
        in_bytes = 2 * 2 * rt * ht * itemsize
        out_bytes = 3 * 2 * rt * 128 * 4
        tmp_bytes = 6 * rt * ht * 4
        vmem_limit = int(min(vmem_cap,
                             max(32 << 20,
                                 in_bytes + out_bytes + tmp_bytes + (8 << 20))))

        po_out, pe_out, ss_out = pl.pallas_call(
            kernel,
            out_shape=(out_sds, out_sds, out_sds),
            grid_spec=pltpu.PrefetchScalarGridSpec(
                num_scalar_prefetch=0,
                grid=grid,
                in_specs=[in_spec, in_spec],
                out_specs=[out_spec, out_spec, out_spec],
            ),
            compiler_params=pltpu.CompilerParams(
                dimension_semantics=("parallel", "parallel", "arbitrary"),
                vmem_limit_bytes=vmem_limit,
            ),
            cost_estimate=pl.CostEstimate(
                flops=6 * rows * hw,
                transcendentals=0,
                bytes_accessed=2 * rows * hw * itemsize + 3 * hw_outer * r_pad * 4,
            ),
        )(orig2, enh2)

        # ---- tiny O(B*C) epilogue in plain JAX (cosine + ReLU + combine) ----
        po_rows = jnp.sum(po_out[:, :rows, 0], axis=0)   # sum the hw_outer partials
        pe_rows = jnp.sum(pe_out[:, :rows, 0], axis=0)
        sumsq = jnp.sum(ss_out[:, :rows, 0])

        orig_pooled = po_rows.reshape(B, C) / hw         # adaptive_avg_pool2d((1,1))
        enh_pooled = pe_rows.reshape(B, C) / hw
        text = text_pooled.astype(jnp.float32)

        def cosine(x, y):
            # F.cosine_similarity: clamp(||x||^2 * ||y||^2, eps^2) before sqrt.
            w12 = jnp.sum(x * y, axis=-1)
            w1 = jnp.sum(x * x, axis=-1)
            w2 = jnp.sum(y * y, axis=-1)
            return w12 / jnp.sqrt(jnp.maximum(w1 * w2, _EPS * _EPS))

        orig_sim = cosine(orig_pooled, text)
        enh_sim = cosine(enh_pooled, text)
        improvement = jnp.maximum(orig_sim - enh_sim + margin, 0.0)

        if reduction == "mean":
            imp_red = jnp.mean(improvement)
            stab_red = sumsq / (rows * hw)
        else:  # "sum"
            imp_red = jnp.sum(improvement)
            stab_red = sumsq

        return loss_weight * (imp_red + stability_weight * stab_red)

    return loss_fn


def _reference_loss(orig, enh, text, loss_weight=1.0, margin=0.1,
                    stability_weight=0.1, reduction="mean"):
    """Pure-JAX reference mirroring the PyTorch forward (feat_proj=None)."""
    eps = 1e-8
    op = orig.mean(axis=(2, 3))
    ep = enh.mean(axis=(2, 3))

    def cos(x, y):
        w12 = (x * y).sum(-1)
        w1 = (x * x).sum(-1)
        w2 = (y * y).sum(-1)
        return w12 / jnp.sqrt(jnp.maximum(w1 * w2, eps * eps))

    orig_sim = cos(op, text)
    enh_sim = cos(ep, text)
    improvement = jnp.maximum(orig_sim - enh_sim + margin, 0.0)
    stability = (enh - orig) ** 2
    if reduction == "mean":
        improvement = improvement.mean()
        stability = stability.mean()
    else:
        improvement = improvement.sum()
        stability = stability.sum()
    return loss_weight * (improvement + stability_weight * stability)


if __name__ == "__main__":
    # --- case 1: aligned shapes, single-tile grid, f32, 'mean' (default tiling) ---
    B, C, H, W = 2, 4, 16, 16
    k1, k2, k3 = jax.random.split(jax.random.PRNGKey(0), 3)
    orig = jax.random.normal(k1, (B, C, H, W), dtype=jnp.float32)
    enh = orig + 0.1 * jax.random.normal(k2, (B, C, H, W), dtype=jnp.float32)
    text = jax.random.normal(k3, (B, C), dtype=jnp.float32)

    loss_fn = make_feature_refinement_loss(loss_weight=1.0, margin=0.1,
                                           stability_weight=0.1, reduction="mean")
    out = jax.block_until_ready(jax.jit(loss_fn)(orig, enh, text))
    ref = _reference_loss(orig, enh, text)
    assert jnp.allclose(out, ref, rtol=1e-5, atol=1e-5), (out, ref)

    # --- case 1b: same shapes in bf16 (kernel streams bf16, accumulates in f32) ---
    orig_bf = orig.astype(jnp.bfloat16)
    enh_bf = enh.astype(jnp.bfloat16)
    out_bf = jax.block_until_ready(jax.jit(loss_fn)(orig_bf, enh_bf, text))
    ref_bf = _reference_loss(orig_bf.astype(jnp.float32),
                             enh_bf.astype(jnp.float32), text)
    assert jnp.allclose(out_bf, ref_bf, rtol=1e-4, atol=1e-5), (out_bf, ref_bf)

    # --- case 2: ragged rows (15) and ragged hw (400), forced multi-k accumulation,
    #     two 'parallel' row tiles, reduction='sum' (exercises in-kernel tail masking) ---
    B2, C2, H2, W2 = 3, 5, 20, 20
    k4, k5, k6 = jax.random.split(jax.random.PRNGKey(1), 3)
    orig_b = jax.random.normal(k4, (B2, C2, H2, W2), dtype=jnp.float32)
    enh_b = orig_b + 0.05 * jax.random.normal(k5, (B2, C2, H2, W2), dtype=jnp.float32)
    text_b = jax.random.normal(k6, (B2, C2), dtype=jnp.float32)

    loss_fn2 = make_feature_refinement_loss(loss_weight=0.5, margin=0.2,
                                            stability_weight=0.3, reduction="sum",
                                            rows_tile=8, hw_tile=128)
    out2 = jax.block_until_ready(jax.jit(loss_fn2)(orig_b, enh_b, text_b))
    ref2 = _reference_loss(orig_b, enh_b, text_b, loss_weight=0.5, margin=0.2,
                           stability_weight=0.3, reduction="sum")
    assert jnp.allclose(out2, ref2, rtol=1e-5, atol=1e-5), (out2, ref2)

    # --- case 3: tiny B*C (6 rows) -> hw_outer=2 parallel split with an uneven group
    #     (3 hw tiles, kper=2 => one clamped, fully-masked duplicate tile) ---
    B3, C3, H3, W3 = 2, 3, 16, 24
    k7, k8, k9 = jax.random.split(jax.random.PRNGKey(2), 3)
    orig_c = jax.random.normal(k7, (B3, C3, H3, W3), dtype=jnp.float32)
    enh_c = orig_c + 0.05 * jax.random.normal(k8, (B3, C3, H3, W3), dtype=jnp.float32)
    text_c = jax.random.normal(k9, (B3, C3), dtype=jnp.float32)

    loss_fn3 = make_feature_refinement_loss(loss_weight=2.0, margin=0.05,
                                            stability_weight=0.2, reduction="sum",
                                            rows_tile=8, hw_tile=128)
    out3 = jax.block_until_ready(jax.jit(loss_fn3)(orig_c, enh_c, text_c))
    ref3 = _reference_loss(orig_c, enh_c, text_c, loss_weight=2.0, margin=0.05,
                           stability_weight=0.2, reduction="sum")
    assert jnp.allclose(out3, ref3, rtol=1e-5, atol=1e-5), (out3, ref3)

    # TODO(synk): optional feat_proj (a caller-supplied nn.Module) is not modeled;
    # the default feat_proj=None path of the PyTorch module is implemented exactly.
    print("KERNEL_OK")
</pallas_src>

<mosaic_0001>
module attributes {stable_mosaic.version = 11 : i64} {
  func.func @kernel(%arg0: i32, %arg1: i32, %arg2: i32, %arg3: memref<8x256xf32, #tpu.memory_space<vmem>>, %arg4: memref<8x256xf32, #tpu.memory_space<vmem>>, %arg5: memref<1x8x1xf32, #tpu.memory_space<vmem>>, %arg6: memref<1x8x1xf32, #tpu.memory_space<vmem>>, %arg7: memref<1x8x1xf32, #tpu.memory_space<vmem>>) attributes {dimension_semantics = [#tpu.dimension_semantics<parallel>, #tpu.dimension_semantics<parallel>, #tpu.dimension_semantics<arbitrary>], iteration_bounds = array<i64: 1, 1, 1>, scalar_prefetch = 0 : i64, scratch_operands = 0 : i64, tpu.core_type = #tpu.core_type<tc>, window_params = [{transform_indices = @transform_0, window_bounds = array<i64: 8, 256>}, {transform_indices = @transform_1, window_bounds = array<i64: 8, 256>}, {transform_indices = @transform_2, window_bounds = array<i64: 1, 8, 1>}, {transform_indices = @transform_3, window_bounds = array<i64: 1, 8, 1>}, {transform_indices = @transform_4, window_bounds = array<i64: 1, 8, 1>}]} {
    %c0 = arith.constant 0 : index
    %c0_0 = arith.constant 0 : index
    %0 = vector.load %arg3[%c0, %c0_0] : memref<8x256xf32, #tpu.memory_space<vmem>>, vector<8x256xf32>
    %c0_1 = arith.constant 0 : index
    %c0_2 = arith.constant 0 : index
    %1 = vector.load %arg4[%c0_1, %c0_2] : memref<8x256xf32, #tpu.memory_space<vmem>>, vector<8x256xf32>
    %2 = arith.subf %1, %0 : vector<8x256xf32>
    %cst = arith.constant dense<0.000000e+00> : vector<8xf32>
    %3 = vector.multi_reduction <add>, %0, %cst [1] : vector<8x256xf32> to vector<8xf32>
    %4 = vector.shape_cast %3 : vector<8xf32> to vector<8x1xf32>
    %cst_3 = arith.constant dense<0.000000e+00> : vector<8xf32>
    %5 = vector.multi_reduction <add>, %1, %cst_3 [1] : vector<8x256xf32> to vector<8xf32>
    %6 = vector.shape_cast %5 : vector<8xf32> to vector<8x1xf32>
    %7 = arith.mulf %2, %2 : vector<8x256xf32>
    %cst_4 = arith.constant dense<0.000000e+00> : vector<8xf32>
    %8 = vector.multi_reduction <add>, %7, %cst_4 [1] : vector<8x256xf32> to vector<8xf32>
    %9 = vector.shape_cast %8 : vector<8xf32> to vector<8x1xf32>
    %c0_i32 = arith.constant 0 : i32
    %10 = arith.cmpi eq, %arg2, %c0_i32 : i32
    %11 = arith.extui %10 : i1 to i32
    %c0_i32_5 = arith.constant 0 : i32
    %12 = arith.cmpi ne, %11, %c0_i32_5 : i32
    scf.if %12 {
      %cst_24 = arith.constant 0.000000e+00 : f32
      %31 = vector.broadcast %cst_24 : f32 to vector<8x1xf32>
      %c0_25 = arith.constant 0 : index
      %c0_26 = arith.constant 0 : index
      %c0_27 = arith.constant 0 : index
      %32 = vector.load %arg5[%c0_25, %c0_26, %c0_27] : memref<1x8x1xf32, #tpu.memory_space<vmem>>, vector<1x8x1xf32>
      %33 = vector.shape_cast %32 : vector<1x8x1xf32> to vector<8x1xf32>
      %34 = vector.shape_cast %31 : vector<8x1xf32> to vector<1x8x1xf32>
      tpu.vector_store %arg5[%c0_25, %c0_26, %c0_27], %34 {strides = array<i32>} : memref<1x8x1xf32, #tpu.memory_space<vmem>>, vector<1x8x1xf32>,
      %cst_28 = arith.constant 0.000000e+00 : f32
      %35 = vector.broadcast %cst_28 : f32 to vector<8x1xf32>
      %c0_29 = arith.constant 0 : index
      %c0_30 = arith.constant 0 : index
      %c0_31 = arith.constant 0 : index
      %36 = vector.load %arg6[%c0_29, %c0_30, %c0_31] : memref<1x8x1xf32, #tpu.memory_space<vmem>>, vector<1x8x1xf32>
      %37 = vector.shape_cast %36 : vector<1x8x1xf32> to vector<8x1xf32>
      %38 = vector.shape_cast %35 : vector<8x1xf32> to vector<1x8x1xf32>
      tpu.vector_store %arg6[%c0_29, %c0_30, %c0_31], %38 {strides = array<i32>} : memref<1x8x1xf32, #tpu.memory_space<vmem>>, vector<1x8x1xf32>,
      %cst_32 = arith.constant 0.000000e+00 : f32
      %39 = vector.broadcast %cst_32 : f32 to vector<8x1xf32>
      %c0_33 = arith.constant 0 : index
      %c0_34 = arith.constant 0 : index
      %c0_35 = arith.constant 0 : index
      %40 = vector.load %arg7[%c0_33, %c0_34, %c0_35] : memref<1x8x1xf32, #tpu.memory_space<vmem>>, vector<1x8x1xf32>
      %41 = vector.shape_cast %40 : vector<1x8x1xf32> to vector<8x1xf32>
      %42 = vector.shape_cast %39 : vector<8x1xf32> to vector<1x8x1xf32>
      tpu.vector_store %arg7[%c0_33, %c0_34, %c0_35], %42 {strides = array<i32>} : memref<1x8x1xf32, #tpu.memory_space<vmem>>, vector<1x8x1xf32>,
    } else {
    }
    %c0_6 = arith.constant 0 : index
    %c0_7 = arith.constant 0 : index
    %c0_8 = arith.constant 0 : index
    %13 = vector.load %arg5[%c0_6, %c0_7, %c0_8] : memref<1x8x1xf32, #tpu.memory_space<vmem>>, vector<1x8x1xf32>
    %14 = vector.shape_cast %13 : vector<1x8x1xf32> to vector<8x1xf32>
    %15 = arith.addf %14, %4 : vector<8x1xf32>
    %c0_9 = arith.constant 0 : index
    %c0_10 = arith.constant 0 : index
    %c0_11 = arith.constant 0 : index
    %16 = vector.load %arg5[%c0_9, %c0_10, %c0_11] : memref<1x8x1xf32, #tpu.memory_space<vmem>>, vector<1x8x1xf32>
    %17 = vector.shape_cast %16 : vector<1x8x1xf32> to vector<8x1xf32>
    %18 = vector.shape_cast %15 : vector<8x1xf32> to vector<1x8x1xf32>
    tpu.vector_store %arg5[%c0_9, %c0_10, %c0_11], %18 {strides = array<i32>} : memref<1x8x1xf32, #tpu.memory_space<vmem>>, vector<1x8x1xf32>,
    %c0_12 = arith.constant 0 : index
    %c0_13 = arith.constant 0 : index
    %c0_14 = arith.constant 0 : index
    %19 = vector.load %arg6[%c0_12, %c0_13, %c0_14] : memref<1x8x1xf32, #tpu.memory_space<vmem>>, vector<1x8x1xf32>
    %20 = vector.shape_cast %19 : vector<1x8x1xf32> to vector<8x1xf32>
    %21 = arith.addf %20, %6 : vector<8x1xf32>
    %c0_15 = arith.constant 0 : index
    %c0_16 = arith.constant 0 : index
    %c0_17 = arith.constant 0 : index
    %22 = vector.load %arg6[%c0_15, %c0_16, %c0_17] : memref<1x8x1xf32, #tpu.memory_space<vmem>>, vector<1x8x1xf32>
    %23 = vector.shape_cast %22 : vector<1x8x1xf32> to vector<8x1xf32>
    %24 = vector.shape_cast %21 : vector<8x1xf32> to vector<1x8x1xf32>
    tpu.vector_store %arg6[%c0_15, %c0_16, %c0_17], %24 {strides = array<i32>} : memref<1x8x1xf32, #tpu.memory_space<vmem>>, vector<1x8x1xf32>,
    %c0_18 = arith.constant 0 : index
    %c0_19 = arith.constant 0 : index
    %c0_20 = arith.constant 0 : index
    %25 = vector.load %arg7[%c0_18, %c0_19, %c0_20] : memref<1x8x1xf32, #tpu.memory_space<vmem>>, vector<1x8x1xf32>
    %26 = vector.shape_cast %25 : vector<1x8x1xf32> to vector<8x1xf32>
    %27 = arith.addf %26, %9 : vector<8x1xf32>
    %c0_21 = arith.constant 0 : index
    %c0_22 = arith.constant 0 : index
    %c0_23 = arith.constant 0 : index
    %28 = vector.load %arg7[%c0_21, %c0_22, %c0_23] : memref<1x8x1xf32, #tpu.memory_space<vmem>>, vector<1x8x1xf32>
    %29 = vector.shape_cast %28 : vector<1x8x1xf32> to vector<8x1xf32>
    %30 = vector.shape_cast %27 : vector<8x1xf32> to vector<1x8x1xf32>
    tpu.vector_store %arg7[%c0_21, %c0_22, %c0_23], %30 {strides = array<i32>} : memref<1x8x1xf32, #tpu.memory_space<vmem>>, vector<1x8x1xf32>,
    return
  }
  func.func @transform_0(%arg0: i32, %arg1: i32, %arg2: i32) -> (i32, i32) {
    %c1_i32 = arith.constant 1 : i32
    %0 = arith.muli %arg1, %c1_i32 : i32
    %1 = arith.addi %0, %arg2 : i32
    %c0_i32 = arith.constant 0 : i32
    %2 = arith.minsi %1, %c0_i32 : i32
    %c0_i32_0 = arith.constant 0 : i32
    return %arg0, %2 : i32, i32
  }
  func.func @transform_1(%arg0: i32, %arg1: i32, %arg2: i32) -> (i32, i32) {
    %c1_i32 = arith.constant 1 : i32
    %0 = arith.muli %arg1, %c1_i32 : i32
    %1 = arith.addi %0, %arg2 : i32
    %c0_i32 = arith.constant 0 : i32
    %2 = arith.minsi %1, %c0_i32 : i32
    %c0_i32_0 = arith.constant 0 : i32
    return %arg0, %2 : i32, i32
  }
  func.func @transform_2(%arg0: i32, %arg1: i32, %arg2: i32) -> (i32, i32, i32) {
    %c0_i32 = arith.constant 0 : i32
    %c0_i32_0 = arith.constant 0 : i32
    return %arg1, %arg0, %c0_i32 : i32, i32, i32
  }
  func.func @transform_3(%arg0: i32, %arg1: i32, %arg2: i32) -> (i32, i32, i32) {
    %c0_i32 = arith.constant 0 : i32
    %c0_i32_0 = arith.constant 0 : i32
    return %arg1, %arg0, %c0_i32 : i32, i32, i32
  }
  func.func @transform_4(%arg0: i32, %arg1: i32, %arg2: i32) -> (i32, i32, i32) {
    %c0_i32 = arith.constant 0 : i32
    %c0_i32_0 = arith.constant 0 : i32
    return %arg1, %arg0, %c0_i32 : i32, i32, i32
  }
}

</mosaic_0001>

<llo_original>
// kernel: loss_fn.1
$region0: #{loss_fn.1}
  #allocation0 [shape = 'u32[]', space=smem, size = 0x4, offset = 0x4, fixed_abs, tag = 'smem constant byte address 0x4 - core index']
  #allocation1 [shape = 'u32[144,128]{1,0:T(1,128)}', space=vmem, size = 0x12000, scoped, tag = 'internal scratch']
  %s0 = inlined_call_operand.vmem [shape: f32[8,256], index: 0, kind: input, shape index: {}]
  %s1 = inlined_call_operand.vmem [shape: f32[8,256], index: 1, kind: input, shape index: {}]
  %s2 = inlined_call_operand.vmem [shape: f32[1,8,1], index: 2, kind: output, shape index: {0}]
  %s3 = inlined_call_operand.vmem [shape: f32[1,8,1], index: 3, kind: output, shape index: {1}]
  %s4 = inlined_call_operand.vmem [shape: f32[1,8,1], index: 4, kind: output, shape index: {2}]
  %5 = xla_tuple %s2, %s3, %s4
  %s6 = sld [smem:[#allocation0]]
  $region38: #{loss_fn.1} parent=0
    _
  %s8 = ssub.s32 1, %s6
  %s9 = scalar_select 0, %s8, %s6
  // Predicated region
  $region2: #{loss_fn.1} parent=0 // pred_check
    _
  $region3: #{loss_fn.1} parent=0 // pred_check_branch
    %11 = sbr.rel (0) target = $region5
  $region4: #{loss_fn.1} parent=0 // pred_region
    %s12 = sadd.s32 0, 0
    %p13 = scmp.lt.s32.totalorder %s12, 0
    %s14 = scalar_select %p13, %s12, 0
    %s15 = smul.u32 2, %s14
    %p16 = scmp.lt.s32.totalorder %s15, 1
    %s17 = scalar_select %p16, %s15, 1
    %s18 = smul.addr %s17, 8
    %s19 = scalar_lea.vmem %s0, %s18
    %s20 = sadd.s32 0, 0
    %p21 = scmp.lt.s32.totalorder %s20, 0
    %s22 = scalar_select %p21, %s20, 0
    %s23 = smul.u32 2, %s22
  $region5: #{loss_fn.1} parent=0 // pred_fallthru
    _
  // Predicated region
  $region6: #{loss_fn.1} parent=0 // pred_check
    _
  $region7: #{loss_fn.1} parent=0 // pred_check_branch
    %25 = sbr.rel (0) target = $region9
  $region8: #{loss_fn.1} parent=0 // pred_region
    %s26 = sadd.s32 0, 0
    %p27 = scmp.lt.s32.totalorder %s26, 0
    %s28 = scalar_select %p27, %s26, 0
    %s29 = smul.u32 2, %s28
    %p30 = scmp.lt.s32.totalorder %s29, 1
    %s31 = scalar_select %p30, %s29, 1
    %s32 = smul.addr %s31, 8
    %s33 = scalar_lea.vmem %s1, %s32
    %s34 = sadd.s32 0, 0
    %p35 = scmp.lt.s32.totalorder %s34, 0
    %s36 = scalar_select %p35, %s34, 0
    %s37 = smul.u32 2, %s36
  $region9: #{loss_fn.1} parent=0 // pred_fallthru
    _
  %s38 = sadd.s32 0, 0
  %p39 = scmp.lt.s32.totalorder %s38, 0
  %s40 = scalar_select %p39, %s38, 0
  %s41 = smul.u32 2, %s40
  %p42 = scmp.lt.s32.totalorder %s41, 1
  %s43 = scalar_select %p42, %s41, 1
  %s44 = smul.addr %s43, 8
  %s45 = scalar_lea.vmem %s0, %s44
  %s46 = sadd.s32 0, 0
  %p47 = scmp.lt.s32.totalorder %s46, 0
  %s48 = scalar_select %p47, %s46, 0
  %s49 = smul.u32 2, %s48
  %p50 = scmp.lt.s32.totalorder %s49, 1
  %s51 = scalar_select %p50, %s49, 1
  %s52 = smul.addr %s51, 8
  %s53 = scalar_lea.vmem %s1, %s52
  %s54 = sadd.s32 0, 0
  %p55 = scmp.lt.s32.totalorder %s54, 0
  %s56 = scalar_select %p55, %s54, 0
  %s57 = smul.u32 2, %s56
  %p58 = scmp.lt.s32.totalorder %s57, 1
  %s59 = scalar_select %p58, %s57, 1
  %s60 = smul.addr %s59, 8
  %s61 = scalar_lea.vmem %s0, %s60
  %s62 = sadd.s32 0, 0
  %p63 = scmp.lt.s32.totalorder %s62, 0
  %s64 = scalar_select %p63, %s62, 0
  %s65 = smul.u32 2, %s64
  %s66 = sadd.s32 0, 0
  %p67 = scmp.lt.s32.totalorder %s66, 0
  %s68 = scalar_select %p67, %s66, 0
  %s69 = smul.u32 2, %s68
  %p70 = scmp.lt.s32.totalorder %s69, 1
  %s71 = scalar_select %p70, %s69, 1
  %s72 = smul.addr %s71, 8
  %s73 = scalar_lea.vmem %s1, %s72
  %s74 = sadd.s32 0, 0
  %p75 = scmp.lt.s32.totalorder %s74, 0
  %s76 = scalar_select %p75, %s74, 0
  %s77 = smul.u32 2, %s76
  %v78 = vld [vmem:[%s61] sm:$0xff]
  %v79 = vld [vmem:[%s61 + $0x8] sm:$0xff]
  %v80 = vld [vmem:[%s73] sm:$0xff]
  %v81 = vld [vmem:[%s73 + $0x8] sm:$0xff]
  %v82 = vsub.f32 %v80, %v78
  %v83 = vsub.f32 %v81, %v79
  %v84 = vadd.f32 %v78, %v79
  %85 = vadd.xlane.f32.xlu0 %v84
  %v86 = vpop.xlane.xlu0 %85
  %v87 = vadd.f32 %v80, %v81
  %88 = vadd.xlane.f32.xlu0 %v87
  %v89 = vpop.xlane.xlu0 %88
  %v90 = vmul.f32 %v82, %v82
  %v91 = vmul.f32 %v83, %v83
  %v92 = vadd.f32 %v90, %v91
  %93 = vadd.xlane.f32.xlu0 %v92
  %v94 = vpop.xlane.xlu0 %93
  %p95 = scmp.eq.s32.totalorder 0, 0
  // Predicated region
  $region10: #{loss_fn.1} parent=0 // pred_check
    %p96 = pneg %p95
  $region11: #{loss_fn.1} parent=0 // pred_check_branch
    %98 = sbr.rel (%p96) target = $region13
  $region12: #{loss_fn.1} parent=0 // pred_region
    %vm99 = vcmask 7168
    %100 = vst.msk [vmem:[%s2] sm:$0xff] %vm99, 0.0
    %101 = vst.msk [vmem:[%s3] sm:$0xff] %vm99, 0.0
    %102 = vst.msk [vmem:[%s4] sm:$0xff] %vm99, 0.0
  $region13: #{loss_fn.1} parent=0 // pred_fallthru
    _
  %v103 = vld [vmem:[%s2] sm:$0xff]
  %v104 = vadd.f32 %v103, %v86
  %vm105 = vcmask 7168
  %106 = vst.msk [vmem:[%s2] sm:$0xff] %vm105, %v104
  %v107 = vld [vmem:[%s3] sm:$0xff]
  %v108 = vadd.f32 %v107, %v89
  %109 = vst.msk [vmem:[%s3] sm:$0xff] %vm105, %v108
  %v110 = vld [vmem:[%s4] sm:$0xff]
  %v111 = vadd.f32 %v110, %v94
  %112 = vst.msk [vmem:[%s4] sm:$0xff] %vm105, %v111
  // Predicated region
  $region14: #{loss_fn.1} parent=0 // pred_check
    _
  $region15: #{loss_fn.1} parent=0 // pred_check_branch
    %114 = sbr.rel (0) target = $region17
  $region16: #{loss_fn.1} parent=0 // pred_region
    _
  $region17: #{loss_fn.1} parent=0 // pred_fallthru
    _
  // Predicated region
  $region18: #{loss_fn.1} parent=0 // pred_check
    _
  $region19: #{loss_fn.1} parent=0 // pred_check_branch
    %116 = sbr.rel (0) target = $region21
  $region20: #{loss_fn.1} parent=0 // pred_region
    _
  $region21: #{loss_fn.1} parent=0 // pred_fallthru
    _
  // Predicated region
  $region22: #{loss_fn.1} parent=0 // pred_check
    _
  $region23: #{loss_fn.1} parent=0 // pred_check_branch
    %118 = sbr.rel (0) target = $region25
  $region24: #{loss_fn.1} parent=0 // pred_region
    _
  $region25: #{loss_fn.1} parent=0 // pred_fallthru
    _
  // Predicated region
  $region26: #{loss_fn.1} parent=0 // pred_check
    _
  $region27: #{loss_fn.1} parent=0 // pred_check_branch
    %120 = sbr.rel (0) target = $region29
  $region28: #{loss_fn.1} parent=0 // pred_region
    _
  $region29: #{loss_fn.1} parent=0 // pred_fallthru
    _
  // Predicated region
  $region30: #{loss_fn.1} parent=0 // pred_check
    _
  $region31: #{loss_fn.1} parent=0 // pred_check_branch
    %122 = sbr.rel (0) target = $region33
  $region32: #{loss_fn.1} parent=0 // pred_region
    _
  $region33: #{loss_fn.1} parent=0 // pred_fallthru
    _
  // Predicated region
  $region34: #{loss_fn.1} parent=0 // pred_check
    _
  $region35: #{loss_fn.1} parent=0 // pred_check_branch
    %124 = sbr.rel (0) target = $region37
  $region36: #{loss_fn.1} parent=0 // pred_region
    _
  $region37: #{loss_fn.1} parent=0 // pred_fallthru
    _

</llo_original>
